<compile_context>
chip_gen: v7x
topology: tpu7x:2x2x1
jax: 0.10.0
libtpu: 0.0.40
codegen_flags: <defaults>
</compile_context>

<pallas_src>
import jax
import jax.numpy as jnp
from jax.experimental import pallas as pl
from jax.experimental.pallas import tpu as pltpu


def _frozen_bn_kernel(x_ref, scale_ref, bias_ref, o_ref):
    # scale/bias refs are (row_tile, 1) f32; they broadcast along the lane axis.
    # Do the affine math in f32 (matches PyTorch, which keeps params in f32),
    # then cast back to the activation dtype on store.
    x = x_ref[...].astype(jnp.float32)
    o_ref[...] = (x * scale_ref[...] + bias_ref[...]).astype(o_ref.dtype)


def _round_up(v, m):
    return (v + m - 1) // m * m


def frozen_batch_norm_2d(x, weight, bias, running_mean, running_var, eps=1e-5,
                         target_block_bytes=4 << 20):
    """x: (N, C, H, W). weight/bias/running_mean/running_var: (C,) (f32 params)."""
    N, C, H, W = x.shape
    NC = N * C
    HW = H * W

    # --- length-C frozen-BN math, in f32, exactly as the PyTorch module ---
    w32 = weight.astype(jnp.float32)
    b32 = bias.astype(jnp.float32)
    rm32 = running_mean.astype(jnp.float32)
    rv32 = running_var.astype(jnp.float32)
    scale_c = w32 * jax.lax.rsqrt(rv32 + jnp.float32(eps))
    bias_c = b32 - rm32 * scale_c

    # One (scale, bias) value per (n, c) row -> (N*C, 1), kept in f32.
    scale2 = jnp.broadcast_to(scale_c[None, :], (N, C)).reshape(NC, 1)
    bias2 = jnp.broadcast_to(bias_c[None, :], (N, C)).reshape(NC, 1)

    x2 = x.reshape(NC, HW)

    # Lane-dense fast path: pad HW to a multiple of 128 so output stores are
    # full unmasked vst (biggest measured store-side lever for small HW like 7x7).
    HW_pad = _round_up(HW, 128)
    if HW_pad != HW:
        x2 = jnp.pad(x2, ((0, 0), (0, HW_pad - HW)))

    # --- tile selection: ~4 MiB x-block, multiple of 8 rows, keep >=4 steps ---
    dtype_bytes = x2.dtype.itemsize
    rows_target = max(8, (target_block_bytes // (HW_pad * dtype_bytes)) // 8 * 8)
    rows_grid = max(8, _round_up(pl.cdiv(NC, 4), 8))  # don't collapse the grid (v7x 2 TCs)
    row_tile = int(min(rows_target, rows_grid, _round_up(NC, 8)))

    grid = (pl.cdiv(NC, row_tile),)
    x_spec = pl.BlockSpec((row_tile, HW_pad), lambda i: (i, 0))
    p_spec = pl.BlockSpec((row_tile, 1), lambda i: (i, 0))

    # VMEM budget: in + out blocks double-buffered, plus tiny param blocks.
    x_block_bytes = row_tile * HW_pad * dtype_bytes
    vmem_need = 4 * x_block_bytes + 4 * row_tile * 4 * 128
    vmem_limit = int(min(max(2 * vmem_need, 32 << 20), 48 << 20))  # v7x-safe cap

    out2 = pl.pallas_call(
        _frozen_bn_kernel,
        out_shape=jax.ShapeDtypeStruct((NC, HW_pad), x.dtype),
        grid_spec=pltpu.PrefetchScalarGridSpec(
            num_scalar_prefetch=0,
            grid=grid,
            in_specs=[x_spec, p_spec, p_spec],
            out_specs=x_spec,
        ),
        compiler_params=pltpu.CompilerParams(
            dimension_semantics=("parallel",),
            vmem_limit_bytes=vmem_limit,
        ),
    )(x2, scale2, bias2)

    if HW_pad != HW:
        out2 = out2[:, :HW]
    return out2.reshape(N, C, H, W)


if __name__ == "__main__":
    key = jax.random.PRNGKey(0)
    N, C, H, W = 2, 4, 16, 16

    kx, kw, kb, km, kv = jax.random.split(key, 5)
    x = jax.random.normal(kx, (N, C, H, W), dtype=jnp.float32)

    # Deterministic "frozen" parameters (module init: weight=1, bias=0,
    # mean=0, var=1; perturb deterministically to exercise the math).
    weight = jnp.ones((C,), jnp.float32) + 0.1 * jax.random.normal(kw, (C,))
    bias = jnp.zeros((C,), jnp.float32) + 0.1 * jax.random.normal(kb, (C,))
    running_mean = 0.1 * jax.random.normal(km, (C,))
    running_var = jnp.ones((C,), jnp.float32) + 0.1 * jnp.abs(
        jax.random.normal(kv, (C,)))

    out = frozen_batch_norm_2d(x, weight, bias, running_mean, running_var)
    out = jax.block_until_ready(out)

    # Reference (plain JAX, mirrors the PyTorch forward exactly).
    eps = 1e-5
    scale = weight * jax.lax.rsqrt(running_var + eps)
    ref = x * scale[None, :, None, None] + (bias - running_mean * scale)[
        None, :, None, None]

    assert out.shape == (N, C, H, W)
    assert jnp.allclose(out, ref, atol=1e-6, rtol=1e-6)
    print("KERNEL_OK")
</pallas_src>

<mosaic_0001>
module attributes {stable_mosaic.version = 11 : i64} {
  func.func @_frozen_bn_kernel(%arg0: i32, %arg1: memref<8x256xf32, #tpu.memory_space<vmem>>, %arg2: memref<8x1xf32, #tpu.memory_space<vmem>>, %arg3: memref<8x1xf32, #tpu.memory_space<vmem>>, %arg4: memref<8x256xf32, #tpu.memory_space<vmem>>) attributes {dimension_semantics = [#tpu.dimension_semantics<parallel>], iteration_bounds = array<i64: 1>, scalar_prefetch = 0 : i64, scratch_operands = 0 : i64, tpu.core_type = #tpu.core_type<tc>, window_params = [{transform_indices = @transform_0, window_bounds = array<i64: 8, 256>}, {transform_indices = @transform_1, window_bounds = array<i64: 8, 1>}, {transform_indices = @transform_2, window_bounds = array<i64: 8, 1>}, {transform_indices = @transform_3, window_bounds = array<i64: 8, 256>}]} {
    %c0 = arith.constant 0 : index
    %c0_0 = arith.constant 0 : index
    %0 = vector.load %arg1[%c0, %c0_0] : memref<8x256xf32, #tpu.memory_space<vmem>>, vector<8x256xf32>
    %c0_1 = arith.constant 0 : index
    %c0_2 = arith.constant 0 : index
    %1 = vector.load %arg2[%c0_1, %c0_2] : memref<8x1xf32, #tpu.memory_space<vmem>>, vector<8x1xf32>
    %2 = vector.broadcast %1 : vector<8x1xf32> to vector<8x256xf32>
    %3 = arith.mulf %0, %2 : vector<8x256xf32>
    %c0_3 = arith.constant 0 : index
    %c0_4 = arith.constant 0 : index
    %4 = vector.load %arg3[%c0_3, %c0_4] : memref<8x1xf32, #tpu.memory_space<vmem>>, vector<8x1xf32>
    %5 = vector.broadcast %4 : vector<8x1xf32> to vector<8x256xf32>
    %6 = arith.addf %3, %5 : vector<8x256xf32>
    %c0_5 = arith.constant 0 : index
    %c0_6 = arith.constant 0 : index
    %7 = vector.load %arg4[%c0_5, %c0_6] : memref<8x256xf32, #tpu.memory_space<vmem>>, vector<8x256xf32>
    tpu.vector_store %arg4[%c0_5, %c0_6], %6 {strides = array<i32>} : memref<8x256xf32, #tpu.memory_space<vmem>>, vector<8x256xf32>,
    return
  }
  func.func @transform_0(%arg0: i32) -> (i32, i32) {
    %c0_i32 = arith.constant 0 : i32
    %c0_i32_0 = arith.constant 0 : i32
    return %arg0, %c0_i32 : i32, i32
  }
  func.func @transform_1(%arg0: i32) -> (i32, i32) {
    %c0_i32 = arith.constant 0 : i32
    %c0_i32_0 = arith.constant 0 : i32
    return %arg0, %c0_i32 : i32, i32
  }
  func.func @transform_2(%arg0: i32) -> (i32, i32) {
    %c0_i32 = arith.constant 0 : i32
    %c0_i32_0 = arith.constant 0 : i32
    return %arg0, %c0_i32 : i32, i32
  }
  func.func @transform_3(%arg0: i32) -> (i32, i32) {
    %c0_i32 = arith.constant 0 : i32
    %c0_i32_0 = arith.constant 0 : i32
    return %arg0, %c0_i32 : i32, i32
  }
}

</mosaic_0001>

<llo_original>
// kernel: tpu_custom_call.1
$region0: #{tpu_custom_call.1}
  #allocation0 [shape = 'u32[]', space=smem, size = 0x4, offset = 0x4, fixed_abs, tag = 'smem constant byte address 0x4 - core index']
  #allocation1 [shape = 'u32[144,128]{1,0:T(1,128)}', space=vmem, size = 0x12000, scoped, tag = 'internal scratch']
  %s0 = inlined_call_operand.vmem [shape: f32[8,256], index: 0, kind: input, shape index: {}]
  %s1 = inlined_call_operand.vmem [shape: f32[8,1], index: 1, kind: input, shape index: {}]
  %s2 = inlined_call_operand.vmem [shape: f32[8,1], index: 2, kind: input, shape index: {}]
  %s3 = inlined_call_operand.hbm [shape: f32[8,256], index: 3, kind: output, shape index: {}]
  %s4 = sld [smem:[#allocation0]]
  $region22: #{tpu_custom_call.1} parent=0
    _
  %s6 = ssub.s32 1, %s4
  %s7 = scalar_select 0, %s6, %s4
  $region1: #{tpu_custom_call.1} parent=0
    #allocation2 [shape = 'u8[8192]{0}', space=vmem, size = 0x2000, scoped, tag = 'output window, operand 0, single buffered']
    #allocation3 [shape = 's32[1]{0}', space=sflag, size = 0x4, scoped, tag = 'scoped memory for tpu_custom_call.1']
    %8 = vsyncpa [#allocation3], 0
    // Predicated region
    $region2: #{tpu_custom_call.1} parent=1 // pred_check
      _
    $region3: #{tpu_custom_call.1} parent=1 // pred_check_branch
      %10 = sbr.rel (0) target = $region5
    $region4: #{tpu_custom_call.1} parent=1 // pred_region
      _
    $region5: #{tpu_custom_call.1} parent=1 // pred_fallthru
      _
    // Predicated region
    $region6: #{tpu_custom_call.1} parent=1 // pred_check
      _
    $region7: #{tpu_custom_call.1} parent=1 // pred_check_branch
      %12 = sbr.rel (0) target = $region9
    $region8: #{tpu_custom_call.1} parent=1 // pred_region
      _
    $region9: #{tpu_custom_call.1} parent=1 // pred_fallthru
      _
    // Predicated region
    $region10: #{tpu_custom_call.1} parent=1 // pred_check
      _
    $region11: #{tpu_custom_call.1} parent=1 // pred_check_branch
      %14 = sbr.rel (0) target = $region13
    $region12: #{tpu_custom_call.1} parent=1 // pred_region
      _
    $region13: #{tpu_custom_call.1} parent=1 // pred_fallthru
      _
    %v15 = vld [vmem:[%s0] sm:$0xff]
    %v16 = vld [vmem:[%s0 + $0x8] sm:$0xff]
    %v17 = vld [vmem:[%s1] sm:$0xff]
    %19 = vset.pattern.permute.xlu0 0
    %20 = vperm.xlu0 %19, %v17
    %v21 = vpop.permute.xlu0 %20
    %v23 = vmul.f32 %v15, %v21
    %v24 = vmul.f32 %v16, %v21
    %v25 = vld [vmem:[%s2] sm:$0xff]
    %27 = vset.pattern.permute.xlu0 0
    %28 = vperm.xlu0 %27, %v25
    %v29 = vpop.permute.xlu0 %28
    %v31 = vadd.f32 %v23, %v29
    %v32 = vadd.f32 %v24, %v29
    %33 = vst [vmem:[#allocation2] sm:$0xff] %v31
    %34 = vst [vmem:[#allocation2 + $0x8] sm:$0xff] %v32
    // Predicated region
    $region14: #{tpu_custom_call.1} parent=1 // pred_check
      _
    $region15: #{tpu_custom_call.1} parent=1 // pred_check_branch
      %36 = sbr.rel (0) target = $region17
    $region16: #{tpu_custom_call.1} parent=1 // pred_region
      %s38 = ssub.s32 256, 256
      %39 = vsyncadd [#allocation3], %s38
      %s41 = sshll.u32 [#allocation2], 4
      %s42 = int_to_ptr.vmem [resolvable:$true] %s41
      %44 = dma.vmem_to_hbm [thread:$0]  %s42, 256, %s3, [#allocation3]
    $region17: #{tpu_custom_call.1} parent=1 // pred_fallthru
      _
    // Predicated region
    $region18: #{tpu_custom_call.1} parent=1 // pred_check
      _
    $region19: #{tpu_custom_call.1} parent=1 // pred_check_branch
      %46 = sbr.rel (0) target = $region21
    $region20: #{tpu_custom_call.1} parent=1 // pred_region
      %47 = dma.done [#allocation3], 256
    $region21: #{tpu_custom_call.1} parent=1 // pred_fallthru
      _
    %48 = vsyncpa [#allocation3], 1

</llo_original>
